<compile_context>
chip_gen: v6e
topology: v6e:2x2x1
jax: 0.10.0
libtpu: 0.0.40
codegen_flags: <defaults>
</compile_context>

<pallas_src>
import functools

import jax
import jax.numpy as jnp
from jax.experimental import pallas as pl
from jax.experimental.pallas import tpu as pltpu

ROW_ALIGN = 16   # bf16 packs 16 rows per sublane group
K_ALIGN = 16     # contraction-dim alignment for the bf16 x / w1 tiles
H1, H2, H3 = 256, 256, 128


def _round_up(n, m):
    return (n + m - 1) // m * m


def _pad_axis(a, axis, multiple):
    size = a.shape[axis]
    pad = _round_up(size, multiple) - size
    if pad == 0:
        return a
    widths = [(0, 0)] * a.ndim
    widths[axis] = (0, pad)
    return jnp.pad(a, widths)        # zero fill -> numerically exact padding


def _dqn_mlp_kernel(x_ref,
                    w1_ref, b1_ref,
                    w2_ref, b2_ref,
                    w3_ref, b3_ref,
                    w4_ref, b4_ref,
                    o_ref):
    """Fused 4-layer MLP on one (TB, K) batch tile.

    bf16 matmul operands, f32 accumulation (preferred_element_type), f32
    bias-add / ReLU epilogue, f32 output.
    """
    h = x_ref[...]                                                    # bf16 (TB, Kp)

    h = jnp.dot(h, w1_ref[...], preferred_element_type=jnp.float32) + b1_ref[...]
    h = jnp.maximum(h, 0.0).astype(jnp.bfloat16)

    h = jnp.dot(h, w2_ref[...], preferred_element_type=jnp.float32) + b2_ref[...]
    h = jnp.maximum(h, 0.0).astype(jnp.bfloat16)

    h = jnp.dot(h, w3_ref[...], preferred_element_type=jnp.float32) + b3_ref[...]
    h = jnp.maximum(h, 0.0).astype(jnp.bfloat16)

    h = jnp.dot(h, w4_ref[...], preferred_element_type=jnp.float32) + b4_ref[...]

    o_ref[...] = h.astype(o_ref.dtype)                                # (TB, out_dim) f32


def prepare_params(params):
    """One-time preparation: bf16 casts + w1 K-row padding, hoisted off the
    per-call path.  Padded rows/columns are zero-filled (load-bearing)."""
    return {
        "w1": _pad_axis(params["w1"], 0, K_ALIGN).astype(jnp.bfloat16),
        "w2": params["w2"].astype(jnp.bfloat16),
        "w3": params["w3"].astype(jnp.bfloat16),
        "w4": params["w4"].astype(jnp.bfloat16),
        "b1": params["b1"].astype(jnp.float32),
        "b2": params["b2"].astype(jnp.float32),
        "b3": params["b3"].astype(jnp.float32),
        "b4": params["b4"].astype(jnp.float32),
    }


def _choose_tb(batch, batch_tile):
    """Batch tile: multiple of 16; capped by batch_tile; keeps >= 2 grid steps
    when the batch allows it (v7x has 2 TensorCores per chip)."""
    b_al = _round_up(batch, ROW_ALIGN)
    if b_al <= ROW_ALIGN:
        return ROW_ALIGN
    tb = min(batch_tile, _round_up(pl.cdiv(b_al, 2), ROW_ALIGN))
    return max(ROW_ALIGN, _round_up(tb, ROW_ALIGN))


@functools.partial(jax.jit, static_argnames=("batch_tile",))
def dqn_forward(x, prepped, *, batch_tile=512):
    """AdvancedDQNetwork forward pass.

    x:       (B, input_dim) float32
    prepped: output of prepare_params() (bf16 weights, f32 biases).
    Returns  (B, output_dim) float32.
    """
    w1, w2, w3, w4 = prepped["w1"], prepped["w2"], prepped["w3"], prepped["w4"]
    b1, b2, b3, b4 = prepped["b1"], prepped["b2"], prepped["b3"], prepped["b4"]

    B = x.shape[0]
    Kp = w1.shape[0]
    out_dim = w4.shape[1]

    TB = _choose_tb(B, batch_tile)
    Bp = _round_up(B, TB)
    grid = (Bp // TB,)

    # Per-call x prep: bf16 cast + (tiny) K alignment + batch padding.
    xp = _pad_axis(x.astype(jnp.bfloat16), 1, K_ALIGN)
    assert xp.shape[1] == Kp, "params must come from prepare_params()"
    xp = _pad_axis(xp, 0, TB)

    # VMEM budget: resident weights + double-buffered x/out tiles + headroom.
    weight_bytes = 2 * (Kp * H1 + H1 * H2 + H2 * H3 + H3 * out_dim)
    bias_bytes = 4 * (H1 + H2 + H3 + out_dim)
    x_tile = 2 * TB * Kp * 2            # double-buffered bf16 input tile
    o_tile = 2 * TB * out_dim * 4       # double-buffered f32 output tile
    interm = 4 * TB * (H1 + H2 + H3 + out_dim)
    vmem_limit = min(
        64 << 20,
        max(32 << 20, 2 * (weight_bytes + bias_bytes + x_tile + o_tile + interm)),
    )

    def batch_block(feat):
        # Batch-streamed activation / output tile (auto double-buffered).
        return pl.BlockSpec((TB, feat), lambda i: (i, 0))

    def resident(arr):
        # Constant index_map -> fetched once, stays VMEM-resident across steps.
        return pl.BlockSpec(arr.shape, lambda i: (0, 0))

    out = pl.pallas_call(
        _dqn_mlp_kernel,
        out_shape=jax.ShapeDtypeStruct((Bp, out_dim), jnp.float32),
        grid=grid,
        in_specs=[
            batch_block(Kp),
            resident(w1), resident(b1),
            resident(w2), resident(b2),
            resident(w3), resident(b3),
            resident(w4), resident(b4),
        ],
        out_specs=batch_block(out_dim),
        compiler_params=pltpu.CompilerParams(
            dimension_semantics=("parallel",),   # megacore sharding on v7x
            vmem_limit_bytes=vmem_limit,
        ),
    )(xp, w1, b1, w2, b2, w3, b3, w4, b4)

    return out[:B] if Bp != B else out


def init_params(key, input_dim, output_dim):
    """Deterministic init matching the PyTorch module's shapes.

    nn.Linear stores weight as (out, in); we transpose to (in, out) for x @ W
    and reshape biases to (1, out) for in-kernel broadcast.
    """
    dims = [(256, input_dim), (256, 256), (128, 256), (output_dim, 128)]
    params = {}
    for i, (out_d, in_d) in enumerate(dims, start=1):
        key, kw, kb = jax.random.split(key, 3)
        bound = 1.0 / jnp.sqrt(in_d)
        w = jax.random.uniform(kw, (out_d, in_d), jnp.float32, -bound, bound)
        b = jax.random.uniform(kb, (out_d,), jnp.float32, -bound, bound)
        params[f"w{i}"] = w.T
        params[f"b{i}"] = b.reshape(1, out_d)
    return params


def reference_forward(x, params, dot_dtype=jnp.float32):
    """Pure-JAX reference. dot_dtype=bf16 mimics the kernel's operand casts."""
    def layer(h, w, b, relu):
        y = jnp.dot(h.astype(dot_dtype), w.astype(dot_dtype),
                    preferred_element_type=jnp.float32) + b
        return jnp.maximum(y, 0.0) if relu else y
    h = layer(x, params["w1"], params["b1"], True)
    h = layer(h, params["w2"], params["b2"], True)
    h = layer(h, params["w3"], params["b3"], True)
    return layer(h, params["w4"], params["b4"], False)


if __name__ == "__main__":
    key = jax.random.PRNGKey(0)
    batch, input_dim, output_dim = 8, 16, 4

    kx, kp = jax.random.split(key)
    x = jax.random.normal(kx, (batch, input_dim), jnp.float32)
    params = init_params(kp, input_dim, output_dim)

    # One-time weight prep (hoisted off the per-call path).
    prepped = jax.block_until_ready(prepare_params(params))

    out = dqn_forward(x, prepped)
    out = jax.block_until_ready(out)
    assert out.shape == (batch, output_dim)

    # Tight check vs a bf16-operand / f32-accumulate reference (matches kernel math).
    ref_bf16 = reference_forward(x, params, dot_dtype=jnp.bfloat16)
    assert jnp.allclose(out, ref_bf16, atol=2e-3, rtol=2e-3)

    # Loose check vs the full-f32 reference (bf16 operand rounding only).
    ref_f32 = reference_forward(x, params, dot_dtype=jnp.float32)
    assert jnp.allclose(out, ref_f32, atol=5e-2, rtol=5e-2)

    # Exercise a larger batch so the multi-step / dual-TC path is compiled & checked.
    kx2, _ = jax.random.split(kx)
    xb = jax.random.normal(kx2, (300, input_dim), jnp.float32)
    outb = jax.block_until_ready(dqn_forward(xb, prepped))
    refb = reference_forward(xb, params, dot_dtype=jnp.bfloat16)
    assert outb.shape == (300, output_dim)
    assert jnp.allclose(outb, refb, atol=2e-3, rtol=2e-3)

    print("KERNEL_OK")
</pallas_src>

<mosaic_0001>
module attributes {stable_mosaic.version = 11 : i64} {
  func.func @_dqn_mlp_kernel(%arg0: i32, %arg1: memref<16x16xbf16, #tpu.memory_space<vmem>>, %arg2: memref<16x256xbf16, #tpu.memory_space<vmem>>, %arg3: memref<1x256xf32, #tpu.memory_space<vmem>>, %arg4: memref<256x256xbf16, #tpu.memory_space<vmem>>, %arg5: memref<1x256xf32, #tpu.memory_space<vmem>>, %arg6: memref<256x128xbf16, #tpu.memory_space<vmem>>, %arg7: memref<1x128xf32, #tpu.memory_space<vmem>>, %arg8: memref<128x4xbf16, #tpu.memory_space<vmem>>, %arg9: memref<1x4xf32, #tpu.memory_space<vmem>>, %arg10: memref<16x4xf32, #tpu.memory_space<vmem>>) attributes {dimension_semantics = [#tpu.dimension_semantics<parallel>], iteration_bounds = array<i64: 1>, scalar_prefetch = 0 : i64, scratch_operands = 0 : i64, tpu.core_type = #tpu.core_type<tc>, window_params = [{transform_indices = @transform_0, window_bounds = array<i64: 16, 16>}, {pipeline_mode = #tpu.pipeline_mode<synchronous>, transform_indices = @transform_1, window_bounds = array<i64: 16, 256>}, {pipeline_mode = #tpu.pipeline_mode<synchronous>, transform_indices = @transform_2, window_bounds = array<i64: 1, 256>}, {pipeline_mode = #tpu.pipeline_mode<synchronous>, transform_indices = @transform_3, window_bounds = array<i64: 256, 256>}, {pipeline_mode = #tpu.pipeline_mode<synchronous>, transform_indices = @transform_4, window_bounds = array<i64: 1, 256>}, {pipeline_mode = #tpu.pipeline_mode<synchronous>, transform_indices = @transform_5, window_bounds = array<i64: 256, 128>}, {pipeline_mode = #tpu.pipeline_mode<synchronous>, transform_indices = @transform_6, window_bounds = array<i64: 1, 128>}, {pipeline_mode = #tpu.pipeline_mode<synchronous>, transform_indices = @transform_7, window_bounds = array<i64: 128, 4>}, {pipeline_mode = #tpu.pipeline_mode<synchronous>, transform_indices = @transform_8, window_bounds = array<i64: 1, 4>}, {transform_indices = @transform_9, window_bounds = array<i64: 16, 4>}]} {
    %c0 = arith.constant 0 : index
    %c0_0 = arith.constant 0 : index
    %0 = vector.load %arg1[%c0, %c0_0] : memref<16x16xbf16, #tpu.memory_space<vmem>>, vector<16x16xbf16>
    %c0_1 = arith.constant 0 : index
    %c0_2 = arith.constant 0 : index
    %1 = vector.load %arg2[%c0_1, %c0_2] : memref<16x256xbf16, #tpu.memory_space<vmem>>, vector<16x256xbf16>
    %cst = arith.constant dense<0.000000e+00> : vector<16x256xf32>
    %2 = tpu.matmul %0, %1, %cst {dimension_numbers = #tpu.dot_dimension_numbers<[1], [0], [0], [1], [0, 0, 1, 1], [], []>} : vector<16x16xbf16>, vector<16x256xbf16>, vector<16x256xf32> -> vector<16x256xf32>
    %c0_3 = arith.constant 0 : index
    %c0_4 = arith.constant 0 : index
    %3 = vector.load %arg3[%c0_3, %c0_4] : memref<1x256xf32, #tpu.memory_space<vmem>>, vector<1x256xf32>
    %4 = vector.broadcast %3 : vector<1x256xf32> to vector<16x256xf32>
    %5 = arith.addf %2, %4 : vector<16x256xf32>
    %cst_5 = arith.constant 0.000000e+00 : f32
    %6 = vector.broadcast %cst_5 : f32 to vector<16x256xf32>
    %7 = arith.maximumf %5, %6 : vector<16x256xf32>
    %8 = arith.truncf %7 : vector<16x256xf32> to vector<16x256xbf16>
    %c0_6 = arith.constant 0 : index
    %c0_7 = arith.constant 0 : index
    %9 = vector.load %arg4[%c0_6, %c0_7] : memref<256x256xbf16, #tpu.memory_space<vmem>>, vector<256x256xbf16>
    %cst_8 = arith.constant dense<0.000000e+00> : vector<16x256xf32>
    %10 = tpu.matmul %8, %9, %cst_8 {dimension_numbers = #tpu.dot_dimension_numbers<[1], [0], [0], [1], [0, 0, 1, 1], [], []>} : vector<16x256xbf16>, vector<256x256xbf16>, vector<16x256xf32> -> vector<16x256xf32>
    %c0_9 = arith.constant 0 : index
    %c0_10 = arith.constant 0 : index
    %11 = vector.load %arg5[%c0_9, %c0_10] : memref<1x256xf32, #tpu.memory_space<vmem>>, vector<1x256xf32>
    %12 = vector.broadcast %11 : vector<1x256xf32> to vector<16x256xf32>
    %13 = arith.addf %10, %12 : vector<16x256xf32>
    %cst_11 = arith.constant 0.000000e+00 : f32
    %14 = vector.broadcast %cst_11 : f32 to vector<16x256xf32>
    %15 = arith.maximumf %13, %14 : vector<16x256xf32>
    %16 = arith.truncf %15 : vector<16x256xf32> to vector<16x256xbf16>
    %c0_12 = arith.constant 0 : index
    %c0_13 = arith.constant 0 : index
    %17 = vector.load %arg6[%c0_12, %c0_13] : memref<256x128xbf16, #tpu.memory_space<vmem>>, vector<256x128xbf16>
    %cst_14 = arith.constant dense<0.000000e+00> : vector<16x128xf32>
    %18 = tpu.matmul %16, %17, %cst_14 {dimension_numbers = #tpu.dot_dimension_numbers<[1], [0], [0], [1], [0, 0, 1, 1], [], []>} : vector<16x256xbf16>, vector<256x128xbf16>, vector<16x128xf32> -> vector<16x128xf32>
    %c0_15 = arith.constant 0 : index
    %c0_16 = arith.constant 0 : index
    %19 = vector.load %arg7[%c0_15, %c0_16] : memref<1x128xf32, #tpu.memory_space<vmem>>, vector<1x128xf32>
    %20 = vector.broadcast %19 : vector<1x128xf32> to vector<16x128xf32>
    %21 = arith.addf %18, %20 : vector<16x128xf32>
    %cst_17 = arith.constant 0.000000e+00 : f32
    %22 = vector.broadcast %cst_17 : f32 to vector<16x128xf32>
    %23 = arith.maximumf %21, %22 : vector<16x128xf32>
    %24 = arith.truncf %23 : vector<16x128xf32> to vector<16x128xbf16>
    %c0_18 = arith.constant 0 : index
    %c0_19 = arith.constant 0 : index
    %25 = vector.load %arg8[%c0_18, %c0_19] : memref<128x4xbf16, #tpu.memory_space<vmem>>, vector<128x4xbf16>
    %cst_20 = arith.constant dense<0.000000e+00> : vector<16x4xf32>
    %26 = tpu.matmul %24, %25, %cst_20 {dimension_numbers = #tpu.dot_dimension_numbers<[1], [0], [0], [1], [0, 0, 1, 1], [], []>} : vector<16x128xbf16>, vector<128x4xbf16>, vector<16x4xf32> -> vector<16x4xf32>
    %c0_21 = arith.constant 0 : index
    %c0_22 = arith.constant 0 : index
    %27 = vector.load %arg9[%c0_21, %c0_22] : memref<1x4xf32, #tpu.memory_space<vmem>>, vector<1x4xf32>
    %28 = vector.broadcast %27 : vector<1x4xf32> to vector<16x4xf32>
    %29 = arith.addf %26, %28 : vector<16x4xf32>
    %c0_23 = arith.constant 0 : index
    %c0_24 = arith.constant 0 : index
    %30 = vector.load %arg10[%c0_23, %c0_24] : memref<16x4xf32, #tpu.memory_space<vmem>>, vector<16x4xf32>
    tpu.vector_store %arg10[%c0_23, %c0_24], %29 {strides = array<i32>} : memref<16x4xf32, #tpu.memory_space<vmem>>, vector<16x4xf32>,
    return
  }
  func.func @transform_0(%arg0: i32) -> (i32, i32) {
    %c0_i32 = arith.constant 0 : i32
    %c0_i32_0 = arith.constant 0 : i32
    return %arg0, %c0_i32 : i32, i32
  }
  func.func @transform_1(%arg0: i32) -> (i32, i32) {
    %c0_i32 = arith.constant 0 : i32
    %c0_i32_0 = arith.constant 0 : i32
    %c0_i32_1 = arith.constant 0 : i32
    return %c0_i32, %c0_i32_0 : i32, i32
  }
  func.func @transform_2(%arg0: i32) -> (i32, i32) {
    %c0_i32 = arith.constant 0 : i32
    %c0_i32_0 = arith.constant 0 : i32
    %c0_i32_1 = arith.constant 0 : i32
    return %c0_i32, %c0_i32_0 : i32, i32
  }
  func.func @transform_3(%arg0: i32) -> (i32, i32) {
    %c0_i32 = arith.constant 0 : i32
    %c0_i32_0 = arith.constant 0 : i32
    %c0_i32_1 = arith.constant 0 : i32
    return %c0_i32, %c0_i32_0 : i32, i32
  }
  func.func @transform_4(%arg0: i32) -> (i32, i32) {
    %c0_i32 = arith.constant 0 : i32
    %c0_i32_0 = arith.constant 0 : i32
    %c0_i32_1 = arith.constant 0 : i32
    return %c0_i32, %c0_i32_0 : i32, i32
  }
  func.func @transform_5(%arg0: i32) -> (i32, i32) {
    %c0_i32 = arith.constant 0 : i32
    %c0_i32_0 = arith.constant 0 : i32
    %c0_i32_1 = arith.constant 0 : i32
    return %c0_i32, %c0_i32_0 : i32, i32
  }
  func.func @transform_6(%arg0: i32) -> (i32, i32) {
    %c0_i32 = arith.constant 0 : i32
    %c0_i32_0 = arith.constant 0 : i32
    %c0_i32_1 = arith.constant 0 : i32
    return %c0_i32, %c0_i32_0 : i32, i32
  }
  func.func @transform_7(%arg0: i32) -> (i32, i32) {
    %c0_i32 = arith.constant 0 : i32
    %c0_i32_0 = arith.constant 0 : i32
    %c0_i32_1 = arith.constant 0 : i32
    return %c0_i32, %c0_i32_0 : i32, i32
  }
  func.func @transform_8(%arg0: i32) -> (i32, i32) {
    %c0_i32 = arith.constant 0 : i32
    %c0_i32_0 = arith.constant 0 : i32
    %c0_i32_1 = arith.constant 0 : i32
    return %c0_i32, %c0_i32_0 : i32, i32
  }
  func.func @transform_9(%arg0: i32) -> (i32, i32) {
    %c0_i32 = arith.constant 0 : i32
    %c0_i32_0 = arith.constant 0 : i32
    return %arg0, %c0_i32 : i32, i32
  }
}

</mosaic_0001>

<llo_original>
// kernel: dqn_forward.1
$region0: #{dqn_forward.1}
  #allocation0 [shape = 'u32[]', space=smem, size = 0x4, offset = 0x4, fixed_abs, tag = 'smem constant byte address 0x4 - core index']
  #allocation1 [shape = 'u32[144,128]{1,0:T(1,128)}', space=vmem, size = 0x12000, scoped, tag = 'internal scratch']
  %s0 = inlined_call_operand.vmem [shape: bf16[16,16], index: 0, kind: input, shape index: {}]
  %s1 = inlined_call_operand.vmem [shape: bf16[16,256], index: 1, kind: input, shape index: {}]
  %s2 = inlined_call_operand.vmem [shape: f32[1,256], index: 2, kind: input, shape index: {}]
  %s3 = inlined_call_operand.hbm [shape: bf16[256,256], index: 3, kind: input, shape index: {}]
  %s4 = inlined_call_operand.vmem [shape: f32[1,256], index: 4, kind: input, shape index: {}]
  %s5 = inlined_call_operand.hbm [shape: bf16[256,128], index: 5, kind: input, shape index: {}]
  %s6 = inlined_call_operand.vmem [shape: f32[1,128], index: 6, kind: input, shape index: {}]
  %s7 = inlined_call_operand.vmem [shape: bf16[128,4], index: 7, kind: input, shape index: {}]
  %s8 = inlined_call_operand.vmem [shape: f32[1,4], index: 8, kind: input, shape index: {}]
  %s9 = inlined_call_operand.vmem [shape: f32[16,4], index: 9, kind: output, shape index: {}]
  %s10 = sld [smem:[#allocation0]]
  $region54: #{dqn_forward.1} parent=0
    _
  %s12 = ssub.s32 1, %s10
  %s13 = scalar_select 0, %s12, %s10
  $region1: #{dqn_forward.1} parent=0
    #allocation2 [shape = 'u8[131072]{0}', space=vmem, size = 0x20000, scoped, tag = 'input window, operand 3, single buffered']
    #allocation3 [shape = 's32[1]{0}', space=sflag, size = 0x4, scoped, tag = 'scoped memory for dqn_forward.1']
    #allocation4 [shape = 'u8[65536]{0}', space=vmem, size = 0x10000, scoped, tag = 'input window, operand 5, single buffered']
    #allocation5 [shape = 's32[1]{0}', space=sflag, size = 0x4, scoped, tag = 'scoped memory for dqn_forward.1']
    %14 = vsyncpa [#allocation3], 0
    %15 = vsyncpa [#allocation5], 0
    // Predicated region
    $region2: #{dqn_forward.1} parent=1 // pred_check
      _
    $region3: #{dqn_forward.1} parent=1 // pred_check_branch
      %17 = sbr.rel (0) target = $region5
    $region4: #{dqn_forward.1} parent=1 // pred_region
      _
    $region5: #{dqn_forward.1} parent=1 // pred_fallthru
      _
    // Predicated region
    $region6: #{dqn_forward.1} parent=1 // pred_check
      _
    $region7: #{dqn_forward.1} parent=1 // pred_check_branch
      %19 = sbr.rel (0) target = $region9
    $region8: #{dqn_forward.1} parent=1 // pred_region
      _
    $region9: #{dqn_forward.1} parent=1 // pred_fallthru
      _
    // Predicated region
    $region10: #{dqn_forward.1} parent=1 // pred_check
      _
    $region11: #{dqn_forward.1} parent=1 // pred_check_branch
      %21 = sbr.rel (0) target = $region13
    $region12: #{dqn_forward.1} parent=1 // pred_region
      _
    $region13: #{dqn_forward.1} parent=1 // pred_fallthru
      _
    // Predicated region
    $region14: #{dqn_forward.1} parent=1 // pred_check
      _
    $region15: #{dqn_forward.1} parent=1 // pred_check_branch
      %23 = sbr.rel (0) target = $region17
    $region16: #{dqn_forward.1} parent=1 // pred_region
      %s25 = ssub.s32 4096, 4096
      %26 = vsyncadd [#allocation3], %s25
      %s27 = sshll.u32 [#allocation2], 4
      %s28 = int_to_ptr.vmem [resolvable:$true] %s27
      %33 = dma.hbm_to_vmem [thread:$0]  %s3, 4096, %s28, [#allocation3], 128, 128, 8
    $region17: #{dqn_forward.1} parent=1 // pred_fallthru
      _
    // Predicated region
    $region18: #{dqn_forward.1} parent=1 // pred_check
      _
    $region19: #{dqn_forward.1} parent=1 // pred_check_branch
      %35 = sbr.rel (0) target = $region21
    $region20: #{dqn_forward.1} parent=1 // pred_region
      _
    $region21: #{dqn_forward.1} parent=1 // pred_fallthru
      _
    // Predicated region
    $region22: #{dqn_forward.1} parent=1 // pred_check
      _
    $region23: #{dqn_forward.1} parent=1 // pred_check_branch
      %37 = sbr.rel (0) target = $region25
    $region24: #{dqn_forward.1} parent=1 // pred_region
      %s39 = ssub.s32 2048, 2048
      %40 = vsyncadd [#allocation5], %s39
      %s41 = sshll.u32 [#allocation4], 4
      %s42 = int_to_ptr.vmem [resolvable:$true] %s41
      %47 = dma.hbm_to_vmem [thread:$0]  %s5, 2048, %s42, [#allocation5], 64, 64, 4
    $region25: #{dqn_forward.1} parent=1 // pred_fallthru
      _
    // Predicated region
    $region26: #{dqn_forward.1} parent=1 // pred_check
      _
    $region27: #{dqn_forward.1} parent=1 // pred_check_branch
      %49 = sbr.rel (0) target = $region29
    $region28: #{dqn_forward.1} parent=1 // pred_region
      _
    $region29: #{dqn_forward.1} parent=1 // pred_fallthru
      _
    // Predicated region
    $region30: #{dqn_forward.1} parent=1 // pred_check
      _
    $region31: #{dqn_forward.1} parent=1 // pred_check_branch
      %51 = sbr.rel (0) target = $region33
    $region32: #{dqn_forward.1} parent=1 // pred_region
      _
    $region33: #{dqn_forward.1} parent=1 // pred_fallthru
      _
    // Predicated region
    $region34: #{dqn_forward.1} parent=1 // pred_check
      _
    $region35: #{dqn_forward.1} parent=1 // pred_check_branch
      %53 = sbr.rel (0) target = $region37
    $region36: #{dqn_forward.1} parent=1 // pred_region
      _
    $region37: #{dqn_forward.1} parent=1 // pred_fallthru
      _
    // Predicated region
    $region38: #{dqn_forward.1} parent=1 // pred_check
      _
    $region39: #{dqn_forward.1} parent=1 // pred_check_branch
      %55 = sbr.rel (0) target = $region41
    $region40: #{dqn_forward.1} parent=1 // pred_region
      %56 = dma.done [#allocation3], 4096
    $region41: #{dqn_forward.1} parent=1 // pred_fallthru
      _
    // Predicated region
    $region42: #{dqn_forward.1} parent=1 // pred_check
      _
    $region43: #{dqn_forward.1} parent=1 // pred_check_branch
      %58 = sbr.rel (0) target = $region45
    $region44: #{dqn_forward.1} parent=1 // pred_region
      %59 = dma.done [#allocation5], 2048
    $region45: #{dqn_forward.1} parent=1 // pred_fallthru
      _
    %v61 = vld [vmem:[%s0] sm:$0xf]
    %v62 = vld [vmem:[%s0 + $0x4] sm:$0xf]
    %v63 = vld [vmem:[%s1] sm:$0xff]
    %v64 = vld [vmem:[%s1 + $0x8] sm:$0xff]
    %v65 = vld [vmem:[%s2] sm:$0x3]
    %v67 = vlaneseq
    %v68 = vshrl.u32 %v67, 7
    %v69 = vsub.s32 0, %v68
    %v70 = vrot.slane %v65, %v69
    %v71 = vlaneseq
    %v72 = vshrl.u32 %v71, 7
    %v73 = vsub.s32 1, %v72
    %v74 = vrot.slane %v65, %v73
    %v79 = vunpack.c.l.b16 %v61
    %v80 = vunpack.c.l.b16 %v62
    %v81 = vpack.c.b16 %v80, %v79
    %v84 = vunpack.c.l.b16 %v63
    %v85 = vunpack.c.h.b16 %v63
    %v86 = vunpack.c.l.b16 %v64
    %v87 = vunpack.c.h.b16 %v64
    %v88 = vpack.c.b16 %v86, %v84
    %v89 = vpack.c.b16 %v87, %v85
    %vm92 = vcmask 130048
    %v94 = vsel %vm92, %v81, 0
    %96 = vmatprep.subr.bf16.mxu0 0
    %97 = vmatpush1.bf16.msra.mxu0 0
    %98 = vmatprep.subr.bf16.mxu0 0
    %99 = vmatpush1.bf16.msra.mxu0 0
    %100 = vmatprep.subr.bf16.mxu0 0
    %101 = vmatpush1.bf16.msra.mxu0 0
    %102 = vmatprep.subr.bf16.mxu0 0
    %103 = vmatpush1.bf16.msra.mxu0 0
    %104 = vmatprep.subr.bf16.mxu0 0
    %105 = vmatpush1.bf16.msra.mxu0 0
    %106 = vmatprep.subr.bf16.mxu0 0
    %107 = vmatpush1.bf16.msra.mxu0 0
    %108 = vmatprep.subr.bf16.mxu0 0
    %109 = vmatpush1.bf16.msra.mxu0 0
    %110 = vmatprep.subr.bf16.mxu0 %v89
    %111 = vmatpush1.bf16.msra.mxu0 %v88
    %112 = vmatprep.subr.bf16.mxu0 0
    %113 = vmatpush2.bf16.msra.mxu0 0
    %114 = vmatprep.subr.bf16.mxu0 0
    %115 = vmatpush2.bf16.msra.mxu0 0
    %116 = vmatprep.subr.bf16.mxu0 0
    %117 = vmatpush2.bf16.msra.mxu0 0
    %118 = vmatprep.subr.bf16.mxu0 0
    %119 = vmatpush2.bf16.msra.mxu0 0
    %120 = vmatprep.subr.bf16.mxu0 0
    %121 = vmatpush2.bf16.msra.mxu0 0
    %122 = vmatprep.subr.bf16.mxu0 0
    %123 = vmatpush2.bf16.msra.mxu0 0
    %124 = vmatprep.subr.bf16.mxu0 0
    %125 = vmatpush2.bf16.msra.mxu0 0
    %126 = vmatprep.subr.bf16.mxu0 0
    %127 = vmatpush2.bf16.msra.mxu0 0
    %128 = vmatprep.mubr.bf16.mxu0 0
    %129 = vmatmul.mubr.bf16.gmra.mxu0 %v94
    %v130 = vpop.f32.mrf.mxu0
    %v131 = vadd.f32 %v70, %v130
    %v132 = vpop.f32.mrf.mxu0
    %v133 = vadd.f32 %v74, %v132
    %v134 = vpop.f32.mrf.mxu0
    %v135 = vadd.f32 %v70, %v134
    %v136 = vpop.f32.mrf.mxu0
    %v137 = vadd.f32 %v74, %v136
    %138 = vdwg.mxu0
    %v139 = vmax.f32 %v131, 0.0
    %v140 = vmax.f32 %v133, 0.0
    %v141 = vmax.f32 %v135, 0.0
    %v142 = vmax.f32 %v137, 0.0
    %v143 = vpack.c.bf16 %v141, %v139
    %v144 = vpack.c.bf16 %v142, %v140
    %v145 = vld [vmem:[#allocation2] sm:$0xff]
    %v146 = vld [vmem:[#allocation2 + $0x8] sm:$0xff]
    %v147 = vld [vmem:[#allocation2 + $0x10] sm:$0xff]
    %v148 = vld [vmem:[#allocation2 + $0x18] sm:$0xff]
    %v149 = vld [vmem:[#allocation2 + $0x20] sm:$0xff]
    %v150 = vld [vmem:[#allocation2 + $0x28] sm:$0xff]
    %v151 = vld [vmem:[#allocation2 + $0x30] sm:$0xff]
    %v152 = vld [vmem:[#allocation2 + $0x38] sm:$0xff]
    %v153 = vld [vmem:[#allocation2 + $0x40] sm:$0xff]
    %v154 = vld [vmem:[#allocation2 + $0x48] sm:$0xff]
    %v155 = vld [vmem:[#allocation2 + $0x50] sm:$0xff]
    %v156 = vld [vmem:[#allocation2 + $0x58] sm:$0xff]
    %v157 = vld [vmem:[#allocation2 + $0x60] sm:$0xff]
    %v158 = vld [vmem:[#allocation2 + $0x68] sm:$0xff]
    %v159 = vld [vmem:[#allocation2 + $0x70] sm:$0xff]
    %v160 = vld [vmem:[#allocation2 + $0x78] sm:$0xff]
    %v161 = vld [vmem:[#allocation2 + $0x80] sm:$0xff]
    %v162 = vld [vmem:[#allocation2 + $0x88] sm:$0xff]
    %v163 = vld [vmem:[#allocation2 + $0x90] sm:$0xff]
    %v164 = vld [vmem:[#allocation2 + $0x98] sm:$0xff]
    %v165 = vld [vmem:[#allocation2 + $0xa0] sm:$0xff]
    %v166 = vld [vmem:[#allocation2 + $0xa8] sm:$0xff]
    %v167 = vld [vmem:[#allocation2 + $0xb0] sm:$0xff]
    %v168 = vld [vmem:[#allocation2 + $0xb8] sm:$0xff]
    %v169 = vld [vmem:[#allocation2 + $0xc0] sm:$0xff]
    %v170 = vld [vmem:[#allocation2 + $0xc8] sm:$0xff]
    %v171 = vld [vmem:[#allocation2 + $0xd0] sm:$0xff]
    %v172 = vld [vmem:[#allocation2 + $0xd8] sm:$0xff]
    %v173 = vld [vmem:[#allocation2 + $0xe0] sm:$0xff]
    %v174 = vld [vmem:[#allocation2 + $0xe8] sm:$0xff]
    %v175 = vld [vmem:[#allocation2 + $0xf0] sm:$0xff]
    %v176 = vld [vmem:[#allocation2 + $0xf8] sm:$0xff]
    %v177 = vld [vmem:[%s4] sm:$0x3]
    %v179 = vlaneseq
    %v180 = vshrl.u32 %v179, 7
    %v181 = vsub.s32 0, %v180
    %v182 = vrot.slane %v177, %v181
    %v183 = vlaneseq
    %v184 = vshrl.u32 %v183, 7
    %v185 = vsub.s32 1, %v184
    %v186 = vrot.slane %v177, %v185
    %v221 = vunpack.c.l.b16 %v145
    %v222 = vunpack.c.h.b16 %v145
    %v223 = vunpack.c.l.b16 %v146
    %v224 = vunpack.c.h.b16 %v146
    %v225 = vunpack.c.l.b16 %v147
    %v226 = vunpack.c.h.b16 %v147
    %v227 = vunpack.c.l.b16 %v148
    %v228 = vunpack.c.h.b16 %v148
    %v229 = vunpack.c.l.b16 %v149
    %v230 = vunpack.c.h.b16 %v149
    %v231 = vunpack.c.l.b16 %v150
    %v232 = vunpack.c.h.b16 %v150
    %v233 = vunpack.c.l.b16 %v151
    %v234 = vunpack.c.h.b16 %v151
    %v235 = vunpack.c.l.b16 %v152
    %v236 = vunpack.c.h.b16 %v152
    %v237 = vunpack.c.l.b16 %v153
    %v238 = vunpack.c.h.b16 %v153
    %v239 = vunpack.c.l.b16 %v154
    %v240 = vunpack.c.h.b16 %v154
    %v241 = vunpack.c.l.b16 %v155
    %v242 = vunpack.c.h.b16 %v155
    %v243 = vunpack.c.l.b16 %v156
    %v244 = vunpack.c.h.b16 %v156
    %v245 = vunpack.c.l.b16 %v157
    %v246 = vunpack.c.h.b16 %v157
    %v247 = vunpack.c.l.b16 %v158
    %v248 = vunpack.c.h.b16 %v158
    %v249 = vunpack.c.l.b16 %v159
    %v250 = vunpack.c.h.b16 %v159
    %v251 = vunpack.c.l.b16 %v160
    %v252 = vunpack.c.h.b16 %v160
    %v253 = vunpack.c.l.b16 %v161
    %v254 = vunpack.c.h.b16 %v161
    %v255 = vunpack.c.l.b16 %v162
    %v256 = vunpack.c.h.b16 %v162
    %v257 = vunpack.c.l.b16 %v163
    %v258 = vunpack.c.h.b16 %v163
    %v259 = vunpack.c.l.b16 %v164
    %v260 = vunpack.c.h.b16 %v164
    %v261 = vunpack.c.l.b16 %v165
    %v262 = vunpack.c.h.b16 %v165
    %v263 = vunpack.c.l.b16 %v166
    %v264 = vunpack.c.h.b16 %v166
    %v265 = vunpack.c.l.b16 %v167
    %v266 = vunpack.c.h.b16 %v167
    %v267 = vunpack.c.l.b16 %v168
    %v268 = vunpack.c.h.b16 %v168
    %v269 = vunpack.c.l.b16 %v169
    %v270 = vunpack.c.h.b16 %v169
    %v271 = vunpack.c.l.b16 %v170
    %v272 = vunpack.c.h.b16 %v170
    %v273 = vunpack.c.l.b16 %v171
    %v274 = vunpack.c.h.b16 %v171
    %v275 = vunpack.c.l.b16 %v172
    %v276 = vunpack.c.h.b16 %v172
    %v277 = vunpack.c.l.b16 %v173
    %v278 = vunpack.c.h.b16 %v173
    %v279 = vunpack.c.l.b16 %v174
    %v280 = vunpack.c.h.b16 %v174
    %v281 = vunpack.c.l.b16 %v175
    %v282 = vunpack.c.h.b16 %v175
    %v283 = vunpack.c.l.b16 %v176
    %v284 = vunpack.c.h.b16 %v176
    %v285 = vpack.c.b16 %v223, %v221
    %v286 = vpack.c.b16 %v224, %v222
    %v287 = vpack.c.b16 %v227, %v225
    %v288 = vpack.c.b16 %v228, %v226
    %v289 = vpack.c.b16 %v231, %v229
    %v290 = vpack.c.b16 %v232, %v230
    %v291 = vpack.c.b16 %v235, %v233
    %v292 = vpack.c.b16 %v236, %v234
    %v293 = vpack.c.b16 %v239, %v237
    %v294 = vpack.c.b16 %v240, %v238
    %v295 = vpack.c.b16 %v243, %v241
    %v296 = vpack.c.b16 %v244, %v242
    %v297 = vpack.c.b16 %v247, %v245
    %v298 = vpack.c.b16 %v248, %v246
    %v299 = vpack.c.b16 %v251, %v249
    %v300 = vpack.c.b16 %v252, %v250
    %v301 = vpack.c.b16 %v255, %v253
    %v302 = vpack.c.b16 %v256, %v254
    %v303 = vpack.c.b16 %v259, %v257
    %v304 = vpack.c.b16 %v260, %v258
    %v305 = vpack.c.b16 %v263, %v261
    %v306 = vpack.c.b16 %v264, %v262
    %v307 = vpack.c.b16 %v267, %v265
    %v308 = vpack.c.b16 %v268, %v266
    %v309 = vpack.c.b16 %v271, %v269
    %v310 = vpack.c.b16 %v272, %v270
    %v311 = vpack.c.b16 %v275, %v273
    %v312 = vpack.c.b16 %v276, %v274
    %v313 = vpack.c.b16 %v279, %v277
    %v314 = vpack.c.b16 %v280, %v278
    %v315 = vpack.c.b16 %v283, %v281
    %v316 = vpack.c.b16 %v284, %v282
    %349 = vmatprep.subr.bf16.mxu0 %v300
    %350 = vmatpush1.bf16.msra.mxu0 %v299
    %351 = vmatprep.subr.bf16.mxu0 %v298
    %352 = vmatpush1.bf16.msra.mxu0 %v297
    %353 = vmatprep.subr.bf16.mxu0 %v296
    %354 = vmatpush1.bf16.msra.mxu0 %v295
    %355 = vmatprep.subr.bf16.mxu0 %v294
    %356 = vmatpush1.bf16.msra.mxu0 %v293
    %357 = vmatprep.subr.bf16.mxu0 %v292
    %358 = vmatpush1.bf16.msra.mxu0 %v291
    %359 = vmatprep.subr.bf16.mxu0 %v290
    %360 = vmatpush1.bf16.msra.mxu0 %v289
    %361 = vmatprep.subr.bf16.mxu0 %v288
    %362 = vmatpush1.bf16.msra.mxu0 %v287
    %363 = vmatprep.subr.bf16.mxu0 %v286
    %364 = vmatpush1.bf16.msra.mxu0 %v285
    %365 = vmatprep.subr.bf16.mxu0 %v316
    %366 = vmatpush2.bf16.msra.mxu0 %v315
    %367 = vmatprep.subr.bf16.mxu0 %v314
    %368 = vmatpush2.bf16.msra.mxu0 %v313
    %369 = vmatprep.subr.bf16.mxu0 %v312
    %370 = vmatpush2.bf16.msra.mxu0 %v311
    %371 = vmatprep.subr.bf16.mxu0 %v310
    %372 = vmatpush2.bf16.msra.mxu0 %v309
    %373 = vmatprep.subr.bf16.mxu0 %v308
    %374 = vmatpush2.bf16.msra.mxu0 %v307
    %375 = vmatprep.subr.bf16.mxu0 %v306
    %376 = vmatpush2.bf16.msra.mxu0 %v305
    %377 = vmatprep.subr.bf16.mxu0 %v304
    %378 = vmatpush2.bf16.msra.mxu0 %v303
    %379 = vmatprep.subr.bf16.mxu0 %v302
    %380 = vmatpush2.bf16.msra.mxu0 %v301
    %381 = vmatprep.mubr.bf16.mxu0 %v144
    %382 = vmatmul.mubr.bf16.gmra.mxu0 %v143
    %v383 = vpop.f32.mrf.mxu0
    %v384 = vadd.f32 %v182, %v383
    %v385 = vpop.f32.mrf.mxu0
    %v386 = vadd.f32 %v186, %v385
    %v387 = vpop.f32.mrf.mxu0
    %v388 = vadd.f32 %v182, %v387
    %v389 = vpop.f32.mrf.mxu0
    %v390 = vadd.f32 %v186, %v389
    %391 = vdwg.mxu0
    %v392 = vmax.f32 %v384, 0.0
    %v393 = vmax.f32 %v386, 0.0
    %v394 = vmax.f32 %v388, 0.0
    %v395 = vmax.f32 %v390, 0.0
    %v396 = vpack.c.bf16 %v394, %v392
    %v397 = vpack.c.bf16 %v395, %v393
    %v398 = vld [vmem:[#allocation4] sm:$0xf]
    %v399 = vld [vmem:[#allocation4 + $0x4] sm:$0xf]
    %v400 = vld [vmem:[#allocation4 + $0x8] sm:$0xf]
    %v401 = vld [vmem:[#allocation4 + $0xc] sm:$0xf]
    %v402 = vld [vmem:[#allocation4 + $0x10] sm:$0xf]
    %v403 = vld [vmem:[#allocation4 + $0x14] sm:$0xf]
    %v404 = vld [vmem:[#allocation4 + $0x18] sm:$0xf]
    %v405 = vld [vmem:[#allocation4 + $0x1c] sm:$0xf]
    %v406 = vld [vmem:[#allocation4 + $0x20] sm:$0xf]
    %v407 = vld [vmem:[#allocation4 + $0x24] sm:$0xf]
    %v408 = vld [vmem:[#allocation4 + $0x28] sm:$0xf]
    %v409 = vld [vmem:[#allocation4 + $0x2c] sm:$0xf]
    %v410 = vld [vmem:[#allocation4 + $0x30] sm:$0xf]
    %v411 = vld [vmem:[#allocation4 + $0x34] sm:$0xf]
    %v412 = vld [vmem:[#allocation4 + $0x38] sm:$0xf]
    %v413 = vld [vmem:[#allocation4 + $0x3c] sm:$0xf]
    %v414 = vld [vmem:[#allocation4 + $0x40] sm:$0xf]
    %v415 = vld [vmem:[#allocation4 + $0x44] sm:$0xf]
    %v416 = vld [vmem:[#allocation4 + $0x48] sm:$0xf]
    %v417 = vld [vmem:[#allocation4 + $0x4c] sm:$0xf]
    %v418 = vld [vmem:[#allocation4 + $0x50] sm:$0xf]
    %v419 = vld [vmem:[#allocation4 + $0x54] sm:$0xf]
    %v420 = vld [vmem:[#allocation4 + $0x58] sm:$0xf]
    %v421 = vld [vmem:[#allocation4 + $0x5c] sm:$0xf]
    %v422 = vld [vmem:[#allocation4 + $0x60] sm:$0xf]
    %v423 = vld [vmem:[#allocation4 + $0x64] sm:$0xf]
    %v424 = vld [vmem:[#allocation4 + $0x68] sm:$0xf]
    %v425 = vld [vmem:[#allocation4 + $0x6c] sm:$0xf]
    %v426 = vld [vmem:[#allocation4 + $0x70] sm:$0xf]
    %v427 = vld [vmem:[#allocation4 + $0x74] sm:$0xf]
    %v428 = vld [vmem:[#allocation4 + $0x78] sm:$0xf]
    %v429 = vld [vmem:[#allocation4 + $0x7c] sm:$0xf]
    %v430 = vld [vmem:[%s6] sm:$0x1]
    %v432 = vlaneseq
    %v433 = vshrl.u32 %v432, 7
    %v434 = vsub.s32 0, %v433
    %v435 = vrot.slane %v430, %v434
    %v469 = vunpack.c.l.b16 %v398
    %v470 = vunpack.c.l.b16 %v399
    %v471 = vunpack.c.l.b16 %v400
    %v472 = vunpack.c.l.b16 %v401
    %v473 = vunpack.c.l.b16 %v402
    %v474 = vunpack.c.l.b16 %v403
    %v475 = vunpack.c.l.b16 %v404
    %v476 = vunpack.c.l.b16 %v405
    %v477 = vunpack.c.l.b16 %v406
    %v478 = vunpack.c.l.b16 %v407
    %v479 = vunpack.c.l.b16 %v408
    %v480 = vunpack.c.l.b16 %v409
    %v481 = vunpack.c.l.b16 %v410
    %v482 = vunpack.c.l.b16 %v411
    %v483 = vunpack.c.l.b16 %v412
    %v484 = vunpack.c.l.b16 %v413
    %v485 = vunpack.c.l.b16 %v414
    %v486 = vunpack.c.l.b16 %v415
    %v487 = vunpack.c.l.b16 %v416
    %v488 = vunpack.c.l.b16 %v417
    %v489 = vunpack.c.l.b16 %v418
    %v490 = vunpack.c.l.b16 %v419
    %v491 = vunpack.c.l.b16 %v420
    %v492 = vunpack.c.l.b16 %v421
    %v493 = vunpack.c.l.b16 %v422
    %v494 = vunpack.c.l.b16 %v423
    %v495 = vunpack.c.l.b16 %v424
    %v496 = vunpack.c.l.b16 %v425
    %v497 = vunpack.c.l.b16 %v426
    %v498 = vunpack.c.l.b16 %v427
    %v499 = vunpack.c.l.b16 %v428
    %v500 = vunpack.c.l.b16 %v429
    %v501 = vpack.c.b16 %v470, %v469
    %v502 = vpack.c.b16 %v472, %v471
    %v503 = vpack.c.b16 %v474, %v473
    %v504 = vpack.c.b16 %v476, %v475
    %v505 = vpack.c.b16 %v478, %v477
    %v506 = vpack.c.b16 %v480, %v479
    %v507 = vpack.c.b16 %v482, %v481
    %v508 = vpack.c.b16 %v484, %v483
    %v509 = vpack.c.b16 %v486, %v485
    %v510 = vpack.c.b16 %v488, %v487
    %v511 = vpack.c.b16 %v490, %v489
    %v512 = vpack.c.b16 %v492, %v491
    %v513 = vpack.c.b16 %v494, %v493
    %v514 = vpack.c.b16 %v496, %v495
    %v515 = vpack.c.b16 %v498, %v497
    %v516 = vpack.c.b16 %v500, %v499
    %533 = vmatprep.subr.bf16.mxu0 0
    %534 = vmatpush1.bf16.msra.mxu0 %v508
    %535 = vmatprep.subr.bf16.mxu0 0
    %536 = vmatpush1.bf16.msra.mxu0 %v507
    %537 = vmatprep.subr.bf16.mxu0 0
    %538 = vmatpush1.bf16.msra.mxu0 %v506
    %539 = vmatprep.subr.bf16.mxu0 0
    %540 = vmatpush1.bf16.msra.mxu0 %v505
    %541 = vmatprep.subr.bf16.mxu0 0
    %542 = vmatpush1.bf16.msra.mxu0 %v504
    %543 = vmatprep.subr.bf16.mxu0 0
    %544 = vmatpush1.bf16.msra.mxu0 %v503
    %545 = vmatprep.subr.bf16.mxu0 0
    %546 = vmatpush1.bf16.msra.mxu0 %v502
    %547 = vmatprep.subr.bf16.mxu0 0
    %548 = vmatpush1.bf16.msra.mxu0 %v501
    %549 = vmatprep.subr.bf16.mxu0 0
    %550 = vmatpush2.bf16.msra.mxu0 %v516
    %551 = vmatprep.subr.bf16.mxu0 0
    %552 = vmatpush2.bf16.msra.mxu0 %v515
    %553 = vmatprep.subr.bf16.mxu0 0
    %554 = vmatpush2.bf16.msra.mxu0 %v514
    %555 = vmatprep.subr.bf16.mxu0 0
    %556 = vmatpush2.bf16.msra.mxu0 %v513
    %557 = vmatprep.subr.bf16.mxu0 0
    %558 = vmatpush2.bf16.msra.mxu0 %v512
    %559 = vmatprep.subr.bf16.mxu0 0
    %560 = vmatpush2.bf16.msra.mxu0 %v511
    %561 = vmatprep.subr.bf16.mxu0 0
    %562 = vmatpush2.bf16.msra.mxu0 %v510
    %563 = vmatprep.subr.bf16.mxu0 0
    %564 = vmatpush2.bf16.msra.mxu0 %v509
    %565 = vmatprep.mubr.bf16.mxu0 %v397
    %566 = vmatmul.mubr.bf16.gmra.mxu0 %v396
    %v567 = vpop.f32.mrf.mxu0
    %v568 = vadd.f32 %v435, %v567
    %v569 = vpop.f32.mrf.mxu0
    %v570 = vpop.f32.mrf.mxu0
    %v571 = vadd.f32 %v435, %v570
    %v572 = vpop.f32.mrf.mxu0
    %573 = vdwg.mxu0
    %v574 = vmax.f32 %v568, 0.0
    %v575 = vmax.f32 %v571, 0.0
    %v576 = vpack.c.bf16 %v575, %v574
    %v577 = vld [vmem:[%s7] sm:$0xf]
    %v578 = vld [vmem:[%s7 + $0x4] sm:$0xf]
    %v579 = vld [vmem:[%s7 + $0x8] sm:$0xf]
    %v580 = vld [vmem:[%s7 + $0xc] sm:$0xf]
    %v581 = vld [vmem:[%s7 + $0x10] sm:$0xf]
    %v582 = vld [vmem:[%s7 + $0x14] sm:$0xf]
    %v583 = vld [vmem:[%s7 + $0x18] sm:$0xf]
    %v584 = vld [vmem:[%s7 + $0x1c] sm:$0xf]
    %v585 = vld [vmem:[%s7 + $0x20] sm:$0xf]
    %v586 = vld [vmem:[%s7 + $0x24] sm:$0xf]
    %v587 = vld [vmem:[%s7 + $0x28] sm:$0xf]
    %v588 = vld [vmem:[%s7 + $0x2c] sm:$0xf]
    %v589 = vld [vmem:[%s7 + $0x30] sm:$0xf]
    %v590 = vld [vmem:[%s7 + $0x34] sm:$0xf]
    %v591 = vld [vmem:[%s7 + $0x38] sm:$0xf]
    %v592 = vld [vmem:[%s7 + $0x3c] sm:$0xf]
    %v593 = vld [vmem:[%s8] sm:$0x1]
    %v595 = vlaneseq
    %v596 = vshrl.u32 %v595, 7
    %v597 = vsub.s32 0, %v596
    %v598 = vrot.slane %v593, %v597
    %v616 = vunpack.c.l.b16 %v577
    %v617 = vunpack.c.l.b16 %v578
    %v618 = vunpack.c.l.b16 %v579
    %v619 = vunpack.c.l.b16 %v580
    %v620 = vunpack.c.l.b16 %v581
    %v621 = vunpack.c.l.b16 %v582
    %v622 = vunpack.c.l.b16 %v583
    %v623 = vunpack.c.l.b16 %v584
    %v624 = vunpack.c.l.b16 %v585
    %v625 = vunpack.c.l.b16 %v586
    %v626 = vunpack.c.l.b16 %v587
    %v627 = vunpack.c.l.b16 %v588
    %v628 = vunpack.c.l.b16 %v589
    %v629 = vunpack.c.l.b16 %v590
    %v630 = vunpack.c.l.b16 %v591
    %v631 = vunpack.c.l.b16 %v592
    %v632 = vpack.c.b16 %v617, %v616
    %v633 = vpack.c.b16 %v619, %v618
    %v634 = vpack.c.b16 %v621, %v620
    %v635 = vpack.c.b16 %v623, %v622
    %v636 = vpack.c.b16 %v625, %v624
    %v637 = vpack.c.b16 %v627, %v626
    %v638 = vpack.c.b16 %v629, %v628
    %v639 = vpack.c.b16 %v631, %v630
    %648 = vmatprep.subr.bf16.mxu0 0
    %649 = vmatpush1.bf16.msra.mxu0 %v639
    %650 = vmatprep.subr.bf16.mxu0 0
    %651 = vmatpush1.bf16.msra.mxu0 %v638
    %652 = vmatprep.subr.bf16.mxu0 0
    %653 = vmatpush1.bf16.msra.mxu0 %v637
    %654 = vmatprep.subr.bf16.mxu0 0
    %655 = vmatpush1.bf16.msra.mxu0 %v636
    %656 = vmatprep.subr.bf16.mxu0 0
    %657 = vmatpush1.bf16.msra.mxu0 %v635
    %658 = vmatprep.subr.bf16.mxu0 0
    %659 = vmatpush1.bf16.msra.mxu0 %v634
    %660 = vmatprep.subr.bf16.mxu0 0
    %661 = vmatpush1.bf16.msra.mxu0 %v633
    %662 = vmatprep.subr.bf16.mxu0 0
    %663 = vmatpush1.bf16.msra.mxu0 %v632
    %664 = vmatprep.subr.bf16.mxu0 0
    %665 = vmatpush2.bf16.msra.mxu0 0
    %666 = vmatprep.subr.bf16.mxu0 0
    %667 = vmatpush2.bf16.msra.mxu0 0
    %668 = vmatprep.subr.bf16.mxu0 0
    %669 = vmatpush2.bf16.msra.mxu0 0
    %670 = vmatprep.subr.bf16.mxu0 0
    %671 = vmatpush2.bf16.msra.mxu0 0
    %672 = vmatprep.subr.bf16.mxu0 0
    %673 = vmatpush2.bf16.msra.mxu0 0
    %674 = vmatprep.subr.bf16.mxu0 0
    %675 = vmatpush2.bf16.msra.mxu0 0
    %676 = vmatprep.subr.bf16.mxu0 0
    %677 = vmatpush2.bf16.msra.mxu0 0
    %678 = vmatprep.subr.bf16.mxu0 0
    %679 = vmatpush2.bf16.msra.mxu0 0
    %680 = vmatprep.mubr.bf16.mxu0 0
    %681 = vmatmul.mubr.bf16.gmra.mxu0 %v576
    %v682 = vpop.f32.mrf.mxu0
    %v683 = vadd.f32 %v598, %v682
    %v684 = vpop.f32.mrf.mxu0
    %v685 = vpop.f32.mrf.mxu0
    %v686 = vadd.f32 %v598, %v685
    %v687 = vpop.f32.mrf.mxu0
    %688 = vdwg.mxu0
    %vm689 = vcmask 31744
    %690 = vst.msk [vmem:[%s9] sm:$0xff] %vm689, %v683
    %691 = vst.msk [vmem:[%s9 + $0x8] sm:$0xff] %vm689, %v686
    // Predicated region
    $region46: #{dqn_forward.1} parent=1 // pred_check
      _
    $region47: #{dqn_forward.1} parent=1 // pred_check_branch
      %693 = sbr.rel (0) target = $region49
    $region48: #{dqn_forward.1} parent=1 // pred_region
      _
    $region49: #{dqn_forward.1} parent=1 // pred_fallthru
      _
    // Predicated region
    $region50: #{dqn_forward.1} parent=1 // pred_check
      _
    $region51: #{dqn_forward.1} parent=1 // pred_check_branch
      %695 = sbr.rel (0) target = $region53
    $region52: #{dqn_forward.1} parent=1 // pred_region
      _
    $region53: #{dqn_forward.1} parent=1 // pred_fallthru
      _
    %696 = vsyncpa [#allocation3], 1
    %697 = vsyncpa [#allocation5], 1

</llo_original>
